<compile_context>
chip_gen: v6e
topology: v6e:2x2x1
jax: 0.10.0
libtpu: 0.0.40
codegen_flags: <defaults>
</compile_context>

<pallas_src>
import jax
import jax.numpy as jnp
from jax.experimental import pallas as pl
from jax.experimental.pallas import tpu as pltpu

_BN_EPS = 1e-5  # PyTorch BatchNorm1d default


def _round_up(n, m):
    return ((n + m - 1) // m) * m


# ---------------------------------------------------------------------------
# Pass 1: per-B-tile partial BatchNorm statistics (sum, sum of squares of y).
# ---------------------------------------------------------------------------
def _bn_stats_kernel(x_ref, w1t_ref, stat_ref):
    # conv1d(k=1) == matmul; bf16 operands feed the MXU natively, accumulate f32.
    y = jnp.dot(x_ref[...].astype(jnp.bfloat16), w1t_ref[...],
                preferred_element_type=jnp.float32)            # (tb, Lh) f32
    stat_ref[0:1, :] = jnp.sum(y, axis=0, keepdims=True)       # partial sum
    stat_ref[1:2, :] = jnp.sum(y * y, axis=0, keepdims=True)   # partial sum-of-sq


# ---------------------------------------------------------------------------
# Pass 2: fused  y = x@W1^T ; z = y*scale + shift ; LeakyReLU ; z@W2^T + b2 ; tanh
# ---------------------------------------------------------------------------
def _paramnet_main_kernel(x_ref, w1t_ref, bn_ref, w2t_ref, b2_ref, o_ref):
    y = jnp.dot(x_ref[...].astype(jnp.bfloat16), w1t_ref[...],
                preferred_element_type=jnp.float32)            # (tb, Lh) f32
    bn = bn_ref[...]                                           # (2, Lh) f32
    z = y * bn[0:1, :] + bn[1:2, :]                            # folded BatchNorm1d
    z = jnp.where(z >= 0.0, z, 0.2 * z)                        # LeakyReLU(0.2)
    out = jnp.dot(z.astype(jnp.bfloat16), w2t_ref[...],
                  preferred_element_type=jnp.float32) + b2_ref[...]
    o_ref[...] = jnp.tanh(out).astype(o_ref.dtype)             # out_act='tanh'


def pack_params(params, lane=128):
    """One-time packing: pre-transpose conv weights to bf16, zero-pad the hidden
    and output channel dims *independently* to lane-dense widths (multiples of
    128).  b1 is deliberately excluded (cancelled by training-mode BN)."""
    w1, gamma, beta, w2, b2 = (params["w1"], params["gamma"], params["beta"],
                               params["w2"], params["b2"])
    H, cin = w1.shape
    P = w2.shape[0]
    Lh = _round_up(H, lane)
    Lp = _round_up(P, lane)

    w1t = jnp.zeros((cin, Lh), jnp.bfloat16).at[:, :H].set(w1.T.astype(jnp.bfloat16))
    w2t = jnp.zeros((Lh, Lp), jnp.bfloat16).at[:H, :P].set(w2.T.astype(jnp.bfloat16))
    gamma_p = jnp.zeros((Lh,), jnp.float32).at[:H].set(gamma)
    beta_p = jnp.zeros((Lh,), jnp.float32).at[:H].set(beta)
    b2_p = jnp.zeros((1, Lp), jnp.float32).at[0, :P].set(b2)
    return {"w1t": w1t, "w2t": w2t, "gamma": gamma_p, "beta": beta_p,
            "b2": b2_p, "H": H, "P": P, "Lh": Lh, "Lp": Lp, "cin": cin}


def _pick_block_b(B, max_tile=2048):
    """Largest power-of-two tile (<= max_tile) dividing B; else a single tile."""
    if B <= max_tile:
        return B
    for cand in (2048, 1024, 512, 256, 128, 64, 32, 16, 8):
        if cand <= max_tile and B % cand == 0:
            return cand
    return B  # TODO(synk): ragged last tile (would need masked BN stats)


def nsd_paramnet_bn_forward(x, packed, *, block_b=None, slice_output=True):
    """x: (B, Cin) float32.  packed: output of pack_params.

    Returns (B, P) bfloat16.  Pass slice_output=False to keep the lane-padded
    (B, Lp) layout for a downstream consumer (avoids materializing the slice)."""
    B, cin = x.shape
    w1t, w2t = packed["w1t"], packed["w2t"]
    Lh, Lp, P = packed["Lh"], packed["Lp"], packed["P"]
    assert cin == packed["cin"]

    if block_b is None:
        block_b = _pick_block_b(B)
    assert B % block_b == 0, "block_b must divide B"   # TODO(synk): ragged B
    assert block_b == B or block_b % 8 == 0, "block_b must be a multiple of 8"
    nb = B // block_b

    parallel = pltpu.CompilerParams(dimension_semantics=("parallel",))

    # ---- Pass 1: partial BN statistics, parallel over B tiles. ----
    stat_parts = pl.pallas_call(
        _bn_stats_kernel,
        out_shape=jax.ShapeDtypeStruct((nb, 2, Lh), jnp.float32),
        grid=(nb,),
        in_specs=[
            pl.BlockSpec((block_b, cin), lambda i: (i, 0)),   # x tile
            pl.BlockSpec((cin, Lh), lambda i: (0, 0)),        # W1^T (resident)
        ],
        out_specs=pl.BlockSpec((None, 2, Lh), lambda i: (i, 0, 0)),
        compiler_params=parallel,
    )(x, w1t)

    # ---- Tiny cross-tile reduce + BN finalization (~2*H elements). ----
    # Folding gamma/beta/mean/var into one per-channel scale/shift keeps the
    # main kernel at 2 VPU ops/element; done here (not in a scratch) because the
    # B-tile grid is parallel, so there is no cross-tile scratch to compute into.
    stats = jnp.sum(stat_parts, axis=0)                       # (2, Lh)
    mean = stats[0] / B
    var = jnp.maximum(stats[1] / B - mean * mean, 0.0)        # biased (train) var
    # TODO(synk): E[y^2]-mean^2 can cancel badly if |mean| >> std; switch to a
    # centered / Welford accumulation if first-layer activations can be huge.
    inv_std = jax.lax.rsqrt(var + _BN_EPS)
    scale = packed["gamma"] * inv_std
    shift = packed["beta"] - mean * scale
    bnvec = jnp.stack([scale, shift], axis=0)                 # (2, Lh) f32

    # ---- Pass 2: fused matmul + BN apply + LeakyReLU + matmul + bias + tanh. ----
    out_padded = pl.pallas_call(
        _paramnet_main_kernel,
        out_shape=jax.ShapeDtypeStruct((B, Lp), jnp.bfloat16),
        grid=(nb,),
        in_specs=[
            pl.BlockSpec((block_b, cin), lambda i: (i, 0)),   # x tile
            pl.BlockSpec((cin, Lh), lambda i: (0, 0)),        # W1^T  (resident)
            pl.BlockSpec((2, Lh), lambda i: (0, 0)),          # scale / shift
            pl.BlockSpec((Lh, Lp), lambda i: (0, 0)),         # W2^T  (resident)
            pl.BlockSpec((1, Lp), lambda i: (0, 0)),          # b2
        ],
        out_specs=pl.BlockSpec((block_b, Lp), lambda i: (i, 0)),
        compiler_params=parallel,
    )(x, w1t, bnvec, w2t, packed["b2"])

    if slice_output:
        return out_padded[:, :P]
    return out_padded


def init_params(key, in_channel, hidden_size, param_dim):
    """Deterministic synthetic init mimicking PyTorch Conv1d defaults."""
    k1, k2, k3, k4, k5, k6 = jax.random.split(key, 6)
    bound1 = 1.0 / jnp.sqrt(in_channel)
    bound2 = 1.0 / jnp.sqrt(hidden_size)
    return {
        "w1": jax.random.uniform(k1, (hidden_size, in_channel), jnp.float32,
                                 -bound1, bound1),
        "b1": jax.random.uniform(k2, (hidden_size,), jnp.float32, -bound1, bound1),
        "gamma": 1.0 + 0.1 * jax.random.normal(k3, (hidden_size,), jnp.float32),
        "beta": 0.1 * jax.random.normal(k4, (hidden_size,), jnp.float32),
        "w2": jax.random.uniform(k5, (param_dim, hidden_size), jnp.float32,
                                 -bound2, bound2),
        "b2": jax.random.uniform(k6, (param_dim,), jnp.float32, -bound2, bound2),
    }


def _reference(x, p):
    """Pure-JAX f32 reference of the PyTorch forward (training-mode BN), incl. b1."""
    y = x @ p["w1"].T + p["b1"]
    mean = jnp.mean(y, axis=0, keepdims=True)
    var = jnp.mean((y - mean) ** 2, axis=0, keepdims=True)
    z = (y - mean) / jnp.sqrt(var + _BN_EPS) * p["gamma"] + p["beta"]
    z = jnp.where(z >= 0, z, 0.2 * z)
    return jnp.tanh(z @ p["w2"].T + p["b2"])


if __name__ == "__main__":
    # layer_depth=1, dense=True -> conv1d(Cin->H), no ResnetBlocks, out_conv1d(H->P)
    B, IN_CHANNEL, HIDDEN, PARAM_DIM = 64, 16, 32, 8

    key = jax.random.PRNGKey(0)
    kx, kp = jax.random.split(key)
    x = jax.random.normal(kx, (B, IN_CHANNEL), jnp.float32)
    params = init_params(kp, IN_CHANNEL, HIDDEN, PARAM_DIM)

    packed = pack_params(params)
    # block_b=16 -> 4 B-tiles per grid: exercises the tiled, parallel two-pass path.
    out = nsd_paramnet_bn_forward(x, packed, block_b=16)
    out = jax.block_until_ready(out)

    ref = _reference(x, params)
    assert out.shape == (B, PARAM_DIM)
    # bf16 MXU operands + bf16 output store -> loosened tolerance vs the f32 ref.
    err = float(jnp.max(jnp.abs(out.astype(jnp.float32) - ref)))
    assert err < 5e-2, f"kernel mismatch vs reference: {err}"

    # TODO(synk): only training-mode (batch-stat) BatchNorm, layer_depth<=1 and
    # out_act='tanh' are implemented; ResnetBlockConv1d stack / tanhshrink /
    # running-stat inference BN are out of scope here.
    print("KERNEL_OK")
</pallas_src>

<mosaic_0001>
module attributes {stable_mosaic.version = 11 : i64} {
  func.func @_bn_stats_kernel(%arg0: i32, %arg1: memref<16x16xf32, #tpu.memory_space<vmem>>, %arg2: memref<16x128xbf16, #tpu.memory_space<vmem>>, %arg3: memref<1x2x128xf32, #tpu.memory_space<vmem>>) attributes {dimension_semantics = [#tpu.dimension_semantics<parallel>], iteration_bounds = array<i64: 4>, scalar_prefetch = 0 : i64, scratch_operands = 0 : i64, tpu.core_type = #tpu.core_type<tc>, window_params = [{transform_indices = @transform_0, window_bounds = array<i64: 16, 16>}, {pipeline_mode = #tpu.pipeline_mode<synchronous>, transform_indices = @transform_1, window_bounds = array<i64: 16, 128>}, {transform_indices = @transform_2, window_bounds = array<i64: 1, 2, 128>}]} {
    %c0 = arith.constant 0 : index
    %c0_0 = arith.constant 0 : index
    %0 = vector.load %arg1[%c0, %c0_0] : memref<16x16xf32, #tpu.memory_space<vmem>>, vector<16x16xf32>
    %1 = arith.truncf %0 : vector<16x16xf32> to vector<16x16xbf16>
    %c0_1 = arith.constant 0 : index
    %c0_2 = arith.constant 0 : index
    %2 = vector.load %arg2[%c0_1, %c0_2] : memref<16x128xbf16, #tpu.memory_space<vmem>>, vector<16x128xbf16>
    %cst = arith.constant dense<0.000000e+00> : vector<16x128xf32>
    %3 = tpu.matmul %1, %2, %cst {dimension_numbers = #tpu.dot_dimension_numbers<[1], [0], [0], [1], [0, 0, 1, 1], [], []>} : vector<16x16xbf16>, vector<16x128xbf16>, vector<16x128xf32> -> vector<16x128xf32>
    %cst_3 = arith.constant dense<0.000000e+00> : vector<128xf32>
    %4 = vector.multi_reduction <add>, %3, %cst_3 [0] : vector<16x128xf32> to vector<128xf32>
    %5 = vector.shape_cast %4 : vector<128xf32> to vector<1x128xf32>
    %c0_4 = arith.constant 0 : index
    %c0_5 = arith.constant 0 : index
    %c0_6 = arith.constant 0 : index
    %6 = vector.load %arg3[%c0_4, %c0_5, %c0_6] : memref<1x2x128xf32, #tpu.memory_space<vmem>>, vector<1x1x128xf32>
    %7 = vector.shape_cast %6 : vector<1x1x128xf32> to vector<1x128xf32>
    %8 = vector.shape_cast %5 : vector<1x128xf32> to vector<1x1x128xf32>
    tpu.vector_store %arg3[%c0_4, %c0_5, %c0_6], %8 {strides = array<i32>} : memref<1x2x128xf32, #tpu.memory_space<vmem>>, vector<1x1x128xf32>,
    %9 = arith.mulf %3, %3 : vector<16x128xf32>
    %cst_7 = arith.constant dense<0.000000e+00> : vector<128xf32>
    %10 = vector.multi_reduction <add>, %9, %cst_7 [0] : vector<16x128xf32> to vector<128xf32>
    %11 = vector.shape_cast %10 : vector<128xf32> to vector<1x128xf32>
    %c0_8 = arith.constant 0 : index
    %c1 = arith.constant 1 : index
    %c0_9 = arith.constant 0 : index
    %12 = vector.load %arg3[%c0_8, %c1, %c0_9] : memref<1x2x128xf32, #tpu.memory_space<vmem>>, vector<1x1x128xf32>
    %13 = vector.shape_cast %12 : vector<1x1x128xf32> to vector<1x128xf32>
    %14 = vector.shape_cast %11 : vector<1x128xf32> to vector<1x1x128xf32>
    tpu.vector_store %arg3[%c0_8, %c1, %c0_9], %14 {strides = array<i32>} : memref<1x2x128xf32, #tpu.memory_space<vmem>>, vector<1x1x128xf32>,
    return
  }
  func.func @transform_0(%arg0: i32) -> (i32, i32) {
    %c0_i32 = arith.constant 0 : i32
    %c0_i32_0 = arith.constant 0 : i32
    return %arg0, %c0_i32 : i32, i32
  }
  func.func @transform_1(%arg0: i32) -> (i32, i32) {
    %c0_i32 = arith.constant 0 : i32
    %c0_i32_0 = arith.constant 0 : i32
    %c0_i32_1 = arith.constant 0 : i32
    return %c0_i32, %c0_i32_0 : i32, i32
  }
  func.func @transform_2(%arg0: i32) -> (i32, i32, i32) {
    %c0_i32 = arith.constant 0 : i32
    %c0_i32_0 = arith.constant 0 : i32
    %c0_i32_1 = arith.constant 0 : i32
    return %arg0, %c0_i32, %c0_i32_0 : i32, i32, i32
  }
}

</mosaic_0001>

<llo_original>
// kernel: tpu_custom_call.1
$region0: #{tpu_custom_call.1}
  #allocation0 [shape = 'u32[]', space=smem, size = 0x4, offset = 0x4, fixed_abs, tag = 'smem constant byte address 0x4 - core index']
  #allocation1 [shape = 'u32[144,128]{1,0:T(1,128)}', space=vmem, size = 0x12000, scoped, tag = 'internal scratch']
  %s0 = inlined_call_operand.vmem [shape: f32[64,16], index: 0, kind: input, shape index: {}]
  %s1 = inlined_call_operand.vmem [shape: bf16[16,128], index: 1, kind: input, shape index: {}]
  %s2 = inlined_call_operand.hbm [shape: f32[4,2,128], index: 2, kind: output, shape index: {}]
  %s3 = sld [smem:[#allocation0]]
  $region41: #{tpu_custom_call.1} parent=0
    _
  %s5 = ssub.s32 1, %s3
  %s6 = scalar_select 0, %s5, %s3
  $region1: #{tpu_custom_call.1} parent=0
    #allocation2 [shape = 'u8[2048]{0}', space=vmem, size = 0x800, scoped, tag = 'output window, operand 0']
    #allocation3 [shape = 's32[2]{0}', space=sflag, size = 0x8, scoped, tag = 'scoped memory for tpu_custom_call.1']
    %7 = vsyncpa [#allocation3], 0
    %s8 = scalar_lea.sflag [#allocation3], 1
    %9 = vsyncpa %s8, 0
    loop: start=0, step=1, limit=6
    $region2: #{tpu_custom_call.1} parent=1 // loop_pre_header
      _
    $region3: #{tpu_custom_call.1} parent=1 // loop_header
      %s11 = sphi 0, %s15
      %p12 = scmp.ge.s32.totalorder %s11, 6
      %s21 = sphi 0, %s23
      %s24 = sphi 0, %s21
      %s25 = sphi 0, %s24
      %s41 = sphi 0, %s25
      %s45 = sphi 0, %s45
      %s47 = sphi 0, %s45
      %s48 = sphi 0, %s47
      %s62 = sphi 0, %s48
      %s68 = sphi 0, %s70
      %s71 = sphi 0, %s68
      %s72 = sphi 0, %s71
      %s88 = sphi 0, %s72
    $region4: #{tpu_custom_call.1} parent=1 // loop_header_branch
      %14 = sbr.rel (%p12) target = $region8
    $region5: #{tpu_custom_call.1} parent=1 // loop_body
      %s16 = ssub.s32 %s11, 1
      %s17 = ssub.s32 %s11, 2
      %s18 = sadd.s32 %s11, 1
      %s19 = ssub.s32 %s11, %s18
      %p20 = scmp.eq.s32.totalorder %s19, 0
      %s22 = sadd.s32 %s21, 1
      %s23 = scalar_select %p20, %s21, %s22
      %p26 = pneg %p20
      %p27 = scmp.eq.s32.totalorder %s11, 3
      %p28 = por %p26, %p27
      %p29 = scmp.ne.s32.totalorder %s21, %s24
      %p30 = scmp.eq.s32.totalorder %s11, 0
      %p31 = por %p29, %p30
      %p32 = scmp.ne.s32.totalorder %s21, %s24
      %p33 = scmp.eq.s32.totalorder %s16, 3
      %p34 = por %p32, %p33
      %p35 = scmp.ne.s32.totalorder %s24, %s25
      %p36 = scmp.eq.s32.totalorder %s16, 0
      %p37 = por %p35, %p36
      %p38 = scmp.ne.s32.totalorder %s24, %s25
      %p39 = scmp.eq.s32.totalorder %s17, 3
      %p40 = por %p38, %p39
      %p42 = scmp.ne.s32.totalorder %s25, %s41
      %p43 = scmp.eq.s32.totalorder %s17, 0
      %p44 = por %p42, %p43
      %s46 = sadd.s32 %s45, 1
      %p49 = scmp.eq.s32.totalorder %s11, 3
      %p50 = scmp.ne.s32.totalorder %s45, %s47
      %p51 = scmp.eq.s32.totalorder %s11, 0
      %p52 = por %p50, %p51
      %p53 = scmp.ne.s32.totalorder %s45, %s47
      %p54 = scmp.eq.s32.totalorder %s16, 3
      %p55 = por %p53, %p54
      %p56 = scmp.ne.s32.totalorder %s47, %s48
      %p57 = scmp.eq.s32.totalorder %s16, 0
      %p58 = por %p56, %p57
      %p59 = scmp.ne.s32.totalorder %s47, %s48
      %p60 = scmp.eq.s32.totalorder %s17, 3
      %p61 = por %p59, %p60
      %p63 = scmp.ne.s32.totalorder %s48, %s62
      %p64 = scmp.eq.s32.totalorder %s17, 0
      %p65 = por %p63, %p64
      %s66 = ssub.s32 %s11, %s18
      %p67 = scmp.eq.s32.totalorder %s66, 0
      %s69 = sadd.s32 %s68, 1
      %s70 = scalar_select %p67, %s68, %s69
      %p73 = pneg %p67
      %p74 = scmp.eq.s32.totalorder %s11, 3
      %p75 = por %p73, %p74
      %p76 = scmp.ne.s32.totalorder %s68, %s71
      %p77 = scmp.eq.s32.totalorder %s11, 0
      %p78 = por %p76, %p77
      %p79 = scmp.ne.s32.totalorder %s68, %s71
      %p80 = scmp.eq.s32.totalorder %s16, 3
      %p81 = por %p79, %p80
      %p82 = scmp.ne.s32.totalorder %s71, %s72
      %p83 = scmp.eq.s32.totalorder %s16, 0
      %p84 = por %p82, %p83
      %p85 = scmp.ne.s32.totalorder %s71, %s72
      %p86 = scmp.eq.s32.totalorder %s17, 3
      %p87 = por %p85, %p86
      %p89 = scmp.ne.s32.totalorder %s72, %s88
      %p90 = scmp.eq.s32.totalorder %s17, 0
      %p91 = por %p89, %p90
      %p92 = scmp.le.s32.totalorder 1, %s11
      %p93 = scmp.lt.s32.totalorder %s11, 5
      %p94 = pnand %p92, %p93
      %p95 = pneg %p94
      // Predicated region
      $region9: #{tpu_custom_call.1} parent=5 // pred_check
        _
      $region10: #{tpu_custom_call.1} parent=5 // pred_check_branch
        %97 = sbr.rel (%p94) target = $region12
      $region11: #{tpu_custom_call.1} parent=5 // pred_region
        %s98 = ssub.s32 %s11, 1
        // Predicated region
        $region13: #{tpu_custom_call.1} parent=11 // pred_check
          %p99 = pneg %p58
        $region14: #{tpu_custom_call.1} parent=11 // pred_check_branch
          %101 = sbr.rel (%p99) target = $region16
        $region15: #{tpu_custom_call.1} parent=11 // pred_region
          _
        $region16: #{tpu_custom_call.1} parent=11 // pred_fallthru
          _
      $region12: #{tpu_custom_call.1} parent=5 // pred_fallthru
        _
      %p102 = scmp.lt.s32.totalorder %s11, 4
      // Predicated region
      $region17: #{tpu_custom_call.1} parent=5 // pred_check
        %p103 = pneg %p102
      $region18: #{tpu_custom_call.1} parent=5 // pred_check_branch
        %105 = sbr.rel (%p103) target = $region20
      $region19: #{tpu_custom_call.1} parent=5 // pred_region
        // Predicated region
        $region21: #{tpu_custom_call.1} parent=19 // pred_check
          %p106 = pneg %p31
        $region22: #{tpu_custom_call.1} parent=19 // pred_check_branch
          %108 = sbr.rel (%p106) target = $region24
        $region23: #{tpu_custom_call.1} parent=19 // pred_region
          %s109 = smul.u32 2, %s11
          %p110 = scmp.lt.s32.totalorder %s109, 7
          %s111 = scalar_select %p110, %s109, 7
          %s112 = smul.addr %s111, 8
          %s113 = scalar_lea.vmem %s0, %s112
          %s114 = smul.u32 2, %s11
        $region24: #{tpu_custom_call.1} parent=19 // pred_fallthru
          _
      $region20: #{tpu_custom_call.1} parent=5 // pred_fallthru
        _
      %p115 = scmp.le.s32.totalorder 1, %s11
      %p116 = scmp.lt.s32.totalorder %s11, 5
      %p117 = pnand %p115, %p116
      %p118 = pneg %p117
      // Predicated region
      $region25: #{tpu_custom_call.1} parent=5 // pred_check
        _
      $region26: #{tpu_custom_call.1} parent=5 // pred_check_branch
        %120 = sbr.rel (%p117) target = $region28
      $region27: #{tpu_custom_call.1} parent=5 // pred_region
        %s121 = ssub.s32 %s11, 1
        %s122 = smul.u32 2, %s16
        %p123 = scmp.lt.s32.totalorder %s122, 7
        %s124 = scalar_select %p123, %s122, 7
        %s125 = smul.addr %s124, 8
        %s126 = scalar_lea.vmem %s0, %s125
        %p127 = pneg %p37
        %p128 = pneg %p34
        %p129 = pneg %p58
        %p130 = pneg %p55
        %p131 = pneg %p84
        %p132 = pneg %p81
        %s133 = sand.u32 %s71, 1
        %s134 = scalar_lea.sflag [#allocation3], %s133
        %s135 = sand.u32 %s71, 1
        %s136 = smul.addr %s135, 2
        %s137 = scalar_lea.vmem [#allocation2], %s136
        %s138 = smul.u32 2, %s16
        %p139 = scmp.lt.s32.totalorder %s138, 7
        %s140 = scalar_select %p139, %s138, 7
        %s141 = smul.addr %s140, 8
        %s142 = scalar_lea.vmem %s0, %s141
        %s143 = smul.u32 2, %s16
        %v145 = vld [vmem:[%s142] sm:$0xff]
        %v146 = vld [vmem:[%s142 + $0x8] sm:$0xff]
        %v147 = vpack.c.bf16 %v146, %v145
        %v148 = vld [vmem:[%s1] sm:$0xf]
        %v149 = vld [vmem:[%s1 + $0x4] sm:$0xf]
        %v152 = vunpack.c.l.b16 %v148
        %v153 = vunpack.c.l.b16 %v149
        %v154 = vpack.c.b16 %v153, %v152
        %vm156 = vcmask 130048
        %v158 = vsel %vm156, %v147, 0
        %160 = vmatprep.subr.bf16.mxu0 0
        %161 = vmatpush1.bf16.msra.mxu0 0
        %162 = vmatprep.subr.bf16.mxu0 0
        %163 = vmatpush1.bf16.msra.mxu0 0
        %164 = vmatprep.subr.bf16.mxu0 0
        %165 = vmatpush1.bf16.msra.mxu0 0
        %166 = vmatprep.subr.bf16.mxu0 0
        %167 = vmatpush1.bf16.msra.mxu0 0
        %168 = vmatprep.subr.bf16.mxu0 0
        %169 = vmatpush1.bf16.msra.mxu0 0
        %170 = vmatprep.subr.bf16.mxu0 0
        %171 = vmatpush1.bf16.msra.mxu0 0
        %172 = vmatprep.subr.bf16.mxu0 0
        %173 = vmatpush1.bf16.msra.mxu0 0
        %174 = vmatprep.subr.bf16.mxu0 0
        %175 = vmatpush1.bf16.msra.mxu0 %v154
        %176 = vmatprep.subr.bf16.mxu0 0
        %177 = vmatpush2.bf16.msra.mxu0 0
        %178 = vmatprep.subr.bf16.mxu0 0
        %179 = vmatpush2.bf16.msra.mxu0 0
        %180 = vmatprep.subr.bf16.mxu0 0
        %181 = vmatpush2.bf16.msra.mxu0 0
        %182 = vmatprep.subr.bf16.mxu0 0
        %183 = vmatpush2.bf16.msra.mxu0 0
        %184 = vmatprep.subr.bf16.mxu0 0
        %185 = vmatpush2.bf16.msra.mxu0 0
        %186 = vmatprep.subr.bf16.mxu0 0
        %187 = vmatpush2.bf16.msra.mxu0 0
        %188 = vmatprep.subr.bf16.mxu0 0
        %189 = vmatpush2.bf16.msra.mxu0 0
        %190 = vmatprep.subr.bf16.mxu0 0
        %191 = vmatpush2.bf16.msra.mxu0 0
        %192 = vmatprep.mubr.bf16.mxu0 0
        %193 = vmatmul.mubr.bf16.gmra.mxu0 %v158
        %v194 = vpop.f32.mrf.mxu0
        %v195 = vadd.f32 0.0, %v194
        %v196 = vpop.f32.mrf.mxu0
        %v197 = vpop.f32.mrf.mxu0
        %v198 = vadd.f32 0.0, %v197
        %v199 = vpop.f32.mrf.mxu0
        %200 = vdwg.mxu0
        %v201 = vadd.f32 %v195, %v198
        %v202 = vrot.slane %v201, 4
        %v203 = vadd.f32 %v201, %v202
        %v204 = vrot.slane %v203, 2
        %v205 = vadd.f32 %v203, %v204
        %v206 = vrot.slane %v205, 1
        %v207 = vadd.f32 %v205, %v206
        %208 = vst [vmem:[%s137] sm:$0x1] %v207
        %v209 = vmul.f32 %v195, %v195
        %v210 = vmul.f32 %v198, %v198
        %v211 = vadd.f32 %v209, %v210
        %v212 = vrot.slane %v211, 4
        %v213 = vadd.f32 %v211, %v212
        %v214 = vrot.slane %v213, 2
        %v215 = vadd.f32 %v213, %v214
        %v216 = vrot.slane %v215, 1
        %v217 = vadd.f32 %v215, %v216
        %218 = vst [vmem:[%s137 + $0x1] sm:$0x1] %v217
        %s219 = sand.u32 %s71, 1
        %s220 = scalar_lea.sflag [#allocation3], %s219
        %s221 = sand.u32 %s71, 1
        %s222 = smul.addr %s221, 2
        %s223 = scalar_lea.vmem [#allocation2], %s222
        // Predicated region
        $region29: #{tpu_custom_call.1} parent=27 // pred_check
          %p224 = pneg %p81
        $region30: #{tpu_custom_call.1} parent=27 // pred_check_branch
          %226 = sbr.rel (%p224) target = $region32
        $region31: #{tpu_custom_call.1} parent=27 // pred_region
          %s228 = ssub.s32 32, 32
          %229 = vsyncadd %s220, %s228
          %s230 = smul.addr %s16, 32
          %s231 = scalar_lea.hbm %s2, %s230
          %s233 = sshll.u32 %s223, 4
          %s234 = int_to_ptr.vmem [resolvable:$true] %s233
          %236 = dma.vmem_to_hbm [thread:$0]  %s234, 32, %s231, %s220
        $region32: #{tpu_custom_call.1} parent=27 // pred_fallthru
          _
      $region28: #{tpu_custom_call.1} parent=5 // pred_fallthru
        _
      %p237 = scmp.le.s32.totalorder 2, %s11
      // Predicated region
      $region33: #{tpu_custom_call.1} parent=5 // pred_check
        %p238 = pneg %p237
      $region34: #{tpu_custom_call.1} parent=5 // pred_check_branch
        %240 = sbr.rel (%p238) target = $region36
      $region35: #{tpu_custom_call.1} parent=5 // pred_region
        %s241 = ssub.s32 %s11, 2
        // Predicated region
        $region37: #{tpu_custom_call.1} parent=35 // pred_check
          %p242 = pneg %p87
        $region38: #{tpu_custom_call.1} parent=35 // pred_check_branch
          %244 = sbr.rel (%p242) target = $region40
        $region39: #{tpu_custom_call.1} parent=35 // pred_region
          %s245 = sand.u32 %s72, 1
          %s246 = scalar_lea.sflag [#allocation3], %s245
          %s247 = sand.u32 %s72, 1
          %s248 = smul.addr %s247, 2
          %s249 = scalar_lea.vmem [#allocation2], %s248
          %250 = dma.done %s246, 32
        $region40: #{tpu_custom_call.1} parent=35 // pred_fallthru
          _
      $region36: #{tpu_custom_call.1} parent=5 // pred_fallthru
        _
    $region6: #{tpu_custom_call.1} parent=1 // loop_footer
      %s15 = sadd.s32 1, %s11
    $region7: #{tpu_custom_call.1} parent=1 // loop_footer_branch
      %10 = sbr.rel target = $region3
    $region8: #{tpu_custom_call.1} parent=1 // loop_exit
      _
    %251 = vsyncpa [#allocation3], 1
    %s252 = scalar_lea.sflag [#allocation3], 1
    %253 = vsyncpa %s252, 1

</llo_original>
